<compile_context>
chip_gen: v7x
topology: tpu7x:2x2x1
jax: 0.10.0
libtpu: 0.0.40
codegen_flags: <defaults>
</compile_context>

<pallas_src>
import functools

import jax
import jax.numpy as jnp
from jax.experimental import pallas as pl
from jax.experimental.pallas import tpu as pltpu

H1 = 400            # fc1 out features (logical)
H2 = 300            # fc2 out features (logical)
LANE = 128
SMALL_BATCH_MAX = 256   # <= this -> single-block, no-grid inference path


def _round_up(x, m):
    return ((x + m - 1) // m) * m


def _pad2d(x, rows, cols):
    out = jnp.zeros((rows, cols), x.dtype)
    return out.at[: x.shape[0], : x.shape[1]].set(x)


def _bf16_elementwise_ok():
    """bf16 VPU/EUP exists on v6e / v7x; keep f32 elementwise on v5e / older."""
    try:
        kind = jax.devices()[0].device_kind.lower()
    except Exception:
        return False
    return ("v6" in kind) or ("v7" in kind) or ("7x" in kind)


def actor_kernel(x_ref, w1_ref, b1_ref, w2_ref, b2_ref, w3_ref, b3_ref,
                 max_a_ref, out_ref, *, ew_dtype):
    """Fused fc1+relu -> fc2+relu -> fc3+tanh*max_action on one batch tile.

    MXU operands are bf16, accumulation is f32; bias/ReLU/tanh run in
    `ew_dtype` (bf16 on v6e/v7x, f32 on v5e).
    """
    x = x_ref[...]
    if x.dtype != jnp.bfloat16:          # trace-time branch; producer may feed bf16
        x = x.astype(jnp.bfloat16)

    # fc1 + relu
    h1 = jnp.dot(x, w1_ref[...], preferred_element_type=jnp.float32)
    h1 = jnp.maximum(h1.astype(ew_dtype) + b1_ref[...].astype(ew_dtype), 0)

    # fc2 + relu
    h2 = jnp.dot(h1.astype(jnp.bfloat16), w2_ref[...],
                 preferred_element_type=jnp.float32)
    h2 = jnp.maximum(h2.astype(ew_dtype) + b2_ref[...].astype(ew_dtype), 0)

    # fc3 + tanh * max_action
    h3 = jnp.dot(h2.astype(jnp.bfloat16), w3_ref[...],
                 preferred_element_type=jnp.float32)
    act = jnp.tanh(h3.astype(ew_dtype) + b3_ref[...].astype(ew_dtype))
    out_ref[...] = (act.astype(jnp.float32) * max_a_ref[0]).astype(out_ref.dtype)


def init_actor_params(key, state_dim, action_dim):
    """Deterministic init mimicking PyTorch nn.Linear (uniform +/- 1/sqrt(fan_in)).
    Weights are [in_features, out_features]; biases are [1, out_features]."""
    dims = [(state_dim, H1), (H1, H2), (H2, action_dim)]
    params = []
    for (fan_in, fan_out) in dims:
        key, kw, kb = jax.random.split(key, 3)
        bound = 1.0 / jnp.sqrt(fan_in)
        w = jax.random.uniform(kw, (fan_in, fan_out), jnp.float32, -bound, bound)
        b = jax.random.uniform(kb, (1, fan_out), jnp.float32, -bound, bound)
        params += [w, b]
    return tuple(params)


def prepare_actor_params(params):
    """Zero-pad to lane multiples and cast weights to bf16 (biases stay f32).

    Padded weight columns AND bias entries are zero, so padded channels are
    exactly 0 after ReLU and contribute nothing downstream.
    """
    w1, b1, w2, b2, w3, b3 = params
    state_dim = w1.shape[0]
    action_dim = w3.shape[1]
    h1p = _round_up(H1, LANE)          # 512
    h2p = _round_up(H2, LANE)          # 384
    ap = _round_up(action_dim, LANE)   # >= 128
    w1p = _pad2d(w1, state_dim, h1p).astype(jnp.bfloat16)
    b1p = _pad2d(b1, 1, h1p).astype(jnp.float32)
    w2p = _pad2d(w2, h1p, h2p).astype(jnp.bfloat16)
    b2p = _pad2d(b2, 1, h2p).astype(jnp.float32)
    w3p = _pad2d(w3, h2p, ap).astype(jnp.bfloat16)
    b3p = _pad2d(b3, 1, ap).astype(jnp.float32)
    return (w1p, b1p, w2p, b2p, w3p, b3p), action_dim


def _pick_batch_tile(B):
    # >= 2 grid steps (v7x megacore gets both TCs busy), multiples of 256 to
    # fill the 2x256^2 MXU on v6e/v7x (also fine for v5e's 4x128^2), capped at
    # 1024 so intermediates + double-buffered I/O fit comfortably everywhere.
    return max(256, min(1024, _round_up((B + 1) // 2, 256)))


def actor_forward(state, padded_params, action_dim, max_action, *,
                  batch_tile=None, return_padded=False):
    """state: [B, state_dim] (f32 or bf16) -> [B, action_dim] f32.

    With return_padded=True the lane-padded [B, 128] block is returned so a
    downstream op (inside the same jit) can slice it lazily, avoiding an extra
    HBM pass over a 32x-padded output.
    """
    w1, b1, w2, b2, w3, b3 = padded_params
    B, state_dim = state.shape
    ap = w3.shape[1]

    ew_dtype = jnp.bfloat16 if _bf16_elementwise_ok() else jnp.float32
    kernel = functools.partial(actor_kernel, ew_dtype=ew_dtype)
    max_a = jnp.asarray([max_action], dtype=jnp.float32)

    flops = 2 * B * (state_dim * w1.shape[1] + w1.shape[1] * w2.shape[1]
                     + w2.shape[1] * ap)
    bytes_accessed = (state.size * state.dtype.itemsize
                      + sum(int(a.size) * a.dtype.itemsize for a in padded_params)
                      + B * ap * 4)
    cost = pl.CostEstimate(flops=int(flops), transcendentals=int(B * ap),
                           bytes_accessed=int(bytes_accessed))

    vmem_spec = pl.BlockSpec(memory_space=pltpu.MemorySpace.VMEM)
    smem_spec = pl.BlockSpec(memory_space=pltpu.MemorySpace.SMEM)

    if batch_tile is None and B <= SMALL_BATCH_MAX:
        # Per-env-step inference path: one VMEM-resident block, no grid, so no
        # pipeline prologue/epilogue overhead at all.
        out = pl.pallas_call(
            kernel,
            out_shape=jax.ShapeDtypeStruct((B, ap), jnp.float32),
            in_specs=[vmem_spec] * 7 + [smem_spec],
            out_specs=vmem_spec,
            cost_estimate=cost,
        )(state, w1, b1, w2, b2, w3, b3, max_a)
        return out if return_padded else out[:, :action_dim]

    # Training-size / vectorized-env path: batch-tiled "parallel" grid.
    # Weights/biases use constant index_maps so they stay VMEM-resident across
    # steps; the batch axis can shard across v7x's 2 TensorCores.
    tb = _pick_batch_tile(B) if batch_tile is None else max(8, _round_up(batch_tile, 8))
    grid = (pl.cdiv(B, tb),)   # ragged last tile handled by masked boundary blocks

    out = pl.pallas_call(
        kernel,
        out_shape=jax.ShapeDtypeStruct((B, ap), jnp.float32),
        grid=grid,
        in_specs=[
            pl.BlockSpec((tb, state_dim), lambda i: (i, 0)),
            pl.BlockSpec(w1.shape, lambda i: (0, 0)),
            pl.BlockSpec(b1.shape, lambda i: (0, 0)),
            pl.BlockSpec(w2.shape, lambda i: (0, 0)),
            pl.BlockSpec(b2.shape, lambda i: (0, 0)),
            pl.BlockSpec(w3.shape, lambda i: (0, 0)),
            pl.BlockSpec(b3.shape, lambda i: (0, 0)),
            smem_spec,
        ],
        out_specs=pl.BlockSpec((tb, ap), lambda i: (i, 0)),
        compiler_params=pltpu.CompilerParams(
            dimension_semantics=("parallel",),
            vmem_limit_bytes=32 * 1024 * 1024),   # headroom for v5e's 16 MiB default
        cost_estimate=cost,
    )(state, w1, b1, w2, b2, w3, b3, max_a)
    return out if return_padded else out[:, :action_dim]


def actor_reference(state, params, max_action):
    """Pure-JAX f32 reference (unpadded PyTorch-equivalent math)."""
    w1, b1, w2, b2, w3, b3 = params
    a = jnp.maximum(state @ w1 + b1, 0.0)
    a = jnp.maximum(a @ w2 + b2, 0.0)
    return jnp.tanh(a @ w3 + b3) * max_action


if __name__ == "__main__":
    state_dim = 16     # e.g. observation_space.shape[0]
    action_dim = 4     # e.g. action_space.shape[0]
    max_action = 2.0   # e.g. float(action_space.high[0])

    key = jax.random.PRNGKey(0)
    key, kx1, kx2 = jax.random.split(key, 3)
    params = init_actor_params(key, state_dim, action_dim)
    padded_params, adim = prepare_actor_params(params)

    # Tolerance note: kernel uses bf16 weights (and, on v6e/v7x, a bf16
    # elementwise epilogue) vs the f32 reference, giving ~1e-2-level
    # quantization error; 6e-2 is intentionally loose for that.
    TOL = 6e-2

    # Small batch (per-step inference) -> single-block, no-grid path.
    state_small = jax.random.normal(kx1, (8, state_dim), jnp.float32)
    out_small = jax.block_until_ready(
        actor_forward(state_small, padded_params, adim, max_action))
    ref_small = actor_reference(state_small, params, max_action)
    assert out_small.shape == (8, action_dim)
    assert float(jnp.max(jnp.abs(out_small - ref_small))) < TOL, \
        "small-batch mismatch vs reference"

    # Training-size batch -> batch-tiled "parallel" grid path
    # (auto tile = 256 -> 2 grid steps; exercises the megacore-friendly path).
    state_big = jax.random.normal(kx2, (512, state_dim), jnp.float32)
    out_big = jax.block_until_ready(
        actor_forward(state_big, padded_params, adim, max_action))
    ref_big = actor_reference(state_big, params, max_action)
    assert out_big.shape == (512, action_dim)
    assert float(jnp.max(jnp.abs(out_big - ref_big))) < TOL, \
        "large-batch mismatch vs reference"

    print("KERNEL_OK")
</pallas_src>

<mosaic_0001>
module attributes {stable_mosaic.version = 11 : i64} {
  func.func @actor_kernel(%arg0: memref<8x16xf32, #tpu.memory_space<vmem>>, %arg1: memref<16x512xbf16, #tpu.memory_space<vmem>>, %arg2: memref<1x512xf32, #tpu.memory_space<vmem>>, %arg3: memref<512x384xbf16, #tpu.memory_space<vmem>>, %arg4: memref<1x384xf32, #tpu.memory_space<vmem>>, %arg5: memref<384x128xbf16, #tpu.memory_space<vmem>>, %arg6: memref<1x128xf32, #tpu.memory_space<vmem>>, %arg7: memref<1xf32, #tpu.memory_space<smem>>, %arg8: memref<8x128xf32, #tpu.memory_space<vmem>>) attributes {dimension_semantics = [], scalar_prefetch = 0 : i64, scratch_operands = 0 : i64, tpu.core_type = #tpu.core_type<tc>} {
    %c0 = arith.constant 0 : index
    %c0_0 = arith.constant 0 : index
    %0 = vector.load %arg0[%c0, %c0_0] : memref<8x16xf32, #tpu.memory_space<vmem>>, vector<8x16xf32>
    %1 = arith.truncf %0 : vector<8x16xf32> to vector<8x16xbf16>
    %c0_1 = arith.constant 0 : index
    %c0_2 = arith.constant 0 : index
    %2 = vector.load %arg1[%c0_1, %c0_2] : memref<16x512xbf16, #tpu.memory_space<vmem>>, vector<16x512xbf16>
    %cst = arith.constant dense<0.000000e+00> : vector<8x512xf32>
    %3 = tpu.matmul %1, %2, %cst {dimension_numbers = #tpu.dot_dimension_numbers<[1], [0], [0], [1], [0, 0, 1, 1], [], []>} : vector<8x16xbf16>, vector<16x512xbf16>, vector<8x512xf32> -> vector<8x512xf32>
    %c0_3 = arith.constant 0 : index
    %c0_4 = arith.constant 0 : index
    %4 = vector.load %arg2[%c0_3, %c0_4] : memref<1x512xf32, #tpu.memory_space<vmem>>, vector<1x512xf32>
    %5 = vector.broadcast %4 : vector<1x512xf32> to vector<8x512xf32>
    %6 = arith.addf %3, %5 : vector<8x512xf32>
    %cst_5 = arith.constant 0.000000e+00 : f32
    %7 = vector.broadcast %cst_5 : f32 to vector<8x512xf32>
    %8 = arith.maximumf %6, %7 : vector<8x512xf32>
    %9 = arith.truncf %8 : vector<8x512xf32> to vector<8x512xbf16>
    %c0_6 = arith.constant 0 : index
    %c0_7 = arith.constant 0 : index
    %10 = vector.load %arg3[%c0_6, %c0_7] : memref<512x384xbf16, #tpu.memory_space<vmem>>, vector<512x384xbf16>
    %cst_8 = arith.constant dense<0.000000e+00> : vector<8x384xf32>
    %11 = tpu.matmul %9, %10, %cst_8 {dimension_numbers = #tpu.dot_dimension_numbers<[1], [0], [0], [1], [0, 0, 1, 1], [], []>} : vector<8x512xbf16>, vector<512x384xbf16>, vector<8x384xf32> -> vector<8x384xf32>
    %c0_9 = arith.constant 0 : index
    %c0_10 = arith.constant 0 : index
    %12 = vector.load %arg4[%c0_9, %c0_10] : memref<1x384xf32, #tpu.memory_space<vmem>>, vector<1x384xf32>
    %13 = vector.broadcast %12 : vector<1x384xf32> to vector<8x384xf32>
    %14 = arith.addf %11, %13 : vector<8x384xf32>
    %cst_11 = arith.constant 0.000000e+00 : f32
    %15 = vector.broadcast %cst_11 : f32 to vector<8x384xf32>
    %16 = arith.maximumf %14, %15 : vector<8x384xf32>
    %17 = arith.truncf %16 : vector<8x384xf32> to vector<8x384xbf16>
    %c0_12 = arith.constant 0 : index
    %c0_13 = arith.constant 0 : index
    %18 = vector.load %arg5[%c0_12, %c0_13] : memref<384x128xbf16, #tpu.memory_space<vmem>>, vector<384x128xbf16>
    %cst_14 = arith.constant dense<0.000000e+00> : vector<8x128xf32>
    %19 = tpu.matmul %17, %18, %cst_14 {dimension_numbers = #tpu.dot_dimension_numbers<[1], [0], [0], [1], [0, 0, 1, 1], [], []>} : vector<8x384xbf16>, vector<384x128xbf16>, vector<8x128xf32> -> vector<8x128xf32>
    %c0_15 = arith.constant 0 : index
    %c0_16 = arith.constant 0 : index
    %20 = vector.load %arg6[%c0_15, %c0_16] : memref<1x128xf32, #tpu.memory_space<vmem>>, vector<1x128xf32>
    %21 = vector.broadcast %20 : vector<1x128xf32> to vector<8x128xf32>
    %22 = arith.addf %19, %21 : vector<8x128xf32>
    %23 = math.tanh %22 : vector<8x128xf32>
    %c0_17 = arith.constant 0 : index
    %24 = memref.load %arg7[%c0_17] : memref<1xf32, #tpu.memory_space<smem>>
    %25 = vector.broadcast %24 : f32 to vector<8x128xf32>
    %26 = arith.mulf %23, %25 : vector<8x128xf32>
    %c0_18 = arith.constant 0 : index
    %c0_19 = arith.constant 0 : index
    %27 = vector.load %arg8[%c0_18, %c0_19] : memref<8x128xf32, #tpu.memory_space<vmem>>, vector<8x128xf32>
    tpu.vector_store %arg8[%c0_18, %c0_19], %26 {strides = array<i32>} : memref<8x128xf32, #tpu.memory_space<vmem>>, vector<8x128xf32>,
    return
  }
}

</mosaic_0001>

<llo_original>
// kernel: tpu_custom_call.1
$region0: #{tpu_custom_call.1}
  #allocation0 [shape = 'u32[]', space=smem, size = 0x4, offset = 0x4, fixed_abs, tag = 'smem constant byte address 0x4 - core index']
  #allocation1 [shape = 'u32[144,128]{1,0:T(1,128)}', space=vmem, size = 0x12000, scoped, tag = 'internal scratch']
  #allocation2 [shape = 'f32[1]{0:T(128)S(6)}', space=smem, size = 0x200, scoped, tag = 'scoped memory for tpu_custom_call.1']
  %s0 = inlined_call_operand.hbm [shape: f32[8,16], index: 0, kind: input, shape index: {}]
  %s1 = inlined_call_operand.hbm [shape: bf16[16,512], index: 1, kind: input, shape index: {}]
  %s2 = inlined_call_operand.vmem [shape: f32[1,512], index: 2, kind: input, shape index: {}]
  %s3 = inlined_call_operand.hbm [shape: bf16[512,384], index: 3, kind: input, shape index: {}]
  %s4 = inlined_call_operand.vmem [shape: f32[1,384], index: 4, kind: input, shape index: {}]
  %s5 = inlined_call_operand.hbm [shape: bf16[384,128], index: 5, kind: input, shape index: {}]
  %s6 = inlined_call_operand.vmem [shape: f32[1,128], index: 6, kind: input, shape index: {}]
  %s7 = inlined_call_operand.<no memory space> [shape: f32[1], index: 7, kind: input, shape index: {}]
  %s8 = inlined_call_operand.hbm [shape: f32[8,128], index: 8, kind: output, shape index: {}]
  %s9 = sld [smem:[#allocation0]]
  $region58: #{tpu_custom_call.1} parent=0
    _
  %s11 = ssub.s32 1, %s9
  %s12 = scalar_select 0, %s11, %s9
  %13 = sst [smem:[#allocation2]] %s7
  $region1: #{tpu_custom_call.1} parent=0
    #allocation3 [shape = 'u8[4096]{0}', space=vmem, size = 0x1000, scoped, tag = 'input window, operand 0, single buffered']
    #allocation4 [shape = 's32[1]{0}', space=sflag, size = 0x4, scoped, tag = 'scoped memory for tpu_custom_call.1']
    #allocation5 [shape = 's32[1]{0}', space=sflag, size = 0x4, scoped, tag = 'scoped memory for tpu_custom_call.1']
    #allocation6 [shape = 'u8[16384]{0}', space=vmem, size = 0x4000, scoped, tag = 'input window, operand 1, single buffered']
    #allocation7 [shape = 's32[1]{0}', space=sflag, size = 0x4, scoped, tag = 'scoped memory for tpu_custom_call.1']
    #allocation8 [shape = 'u8[393216]{0}', space=vmem, size = 0x60000, scoped, tag = 'input window, operand 3, single buffered']
    #allocation9 [shape = 'u8[98304]{0}', space=vmem, size = 0x18000, scoped, tag = 'input window, operand 5, single buffered']
    #allocation10 [shape = 's32[1]{0}', space=sflag, size = 0x4, scoped, tag = 'scoped memory for tpu_custom_call.1']
    #allocation11 [shape = 'u8[4096]{0}', space=vmem, size = 0x1000, scoped, tag = 'output window, operand 0, single buffered']
    %14 = vsyncpa [#allocation4], 0
    %15 = vsyncpa [#allocation7], 0
    %16 = vsyncpa [#allocation10], 0
    %17 = vsyncpa [#allocation5], 0
    // Predicated region
    $region2: #{tpu_custom_call.1} parent=1 // pred_check
      _
    $region3: #{tpu_custom_call.1} parent=1 // pred_check_branch
      %19 = sbr.rel (0) target = $region5
    $region4: #{tpu_custom_call.1} parent=1 // pred_region
      %s21 = ssub.s32 128, 128
      %22 = vsyncadd [#allocation4], %s21
      %s24 = sshll.u32 [#allocation3], 4
      %s25 = int_to_ptr.vmem [resolvable:$true] %s24
      %27 = dma.hbm_to_vmem [thread:$0]  %s0, 128, %s25, [#allocation4]
    $region5: #{tpu_custom_call.1} parent=1 // pred_fallthru
      _
    // Predicated region
    $region6: #{tpu_custom_call.1} parent=1 // pred_check
      _
    $region7: #{tpu_custom_call.1} parent=1 // pred_check_branch
      %29 = sbr.rel (0) target = $region9
    $region8: #{tpu_custom_call.1} parent=1 // pred_region
      %s31 = ssub.s32 512, 512
      %32 = vsyncadd [#allocation7], %s31
      %s33 = sshll.u32 [#allocation6], 4
      %s34 = int_to_ptr.vmem [resolvable:$true] %s33
      %39 = dma.hbm_to_vmem [thread:$0]  %s1, 512, %s34, [#allocation7], 256, 256, 16
    $region9: #{tpu_custom_call.1} parent=1 // pred_fallthru
      _
    // Predicated region
    $region10: #{tpu_custom_call.1} parent=1 // pred_check
      _
    $region11: #{tpu_custom_call.1} parent=1 // pred_check_branch
      %41 = sbr.rel (0) target = $region13
    $region12: #{tpu_custom_call.1} parent=1 // pred_region
      _
    $region13: #{tpu_custom_call.1} parent=1 // pred_fallthru
      _
    // Predicated region
    $region14: #{tpu_custom_call.1} parent=1 // pred_check
      _
    $region15: #{tpu_custom_call.1} parent=1 // pred_check_branch
      %43 = sbr.rel (0) target = $region17
    $region16: #{tpu_custom_call.1} parent=1 // pred_region
      %s45 = ssub.s32 12288, 12288
      %46 = vsyncadd [#allocation7], %s45
      %s47 = sshll.u32 [#allocation8], 4
      %s48 = int_to_ptr.vmem [resolvable:$true] %s47
      %53 = dma.hbm_to_vmem [thread:$0]  %s3, 12288, %s48, [#allocation7], 192, 192, 12
    $region17: #{tpu_custom_call.1} parent=1 // pred_fallthru
      _
    // Predicated region
    $region18: #{tpu_custom_call.1} parent=1 // pred_check
      _
    $region19: #{tpu_custom_call.1} parent=1 // pred_check_branch
      %55 = sbr.rel (0) target = $region21
    $region20: #{tpu_custom_call.1} parent=1 // pred_region
      _
    $region21: #{tpu_custom_call.1} parent=1 // pred_fallthru
      _
    // Predicated region
    $region22: #{tpu_custom_call.1} parent=1 // pred_check
      _
    $region23: #{tpu_custom_call.1} parent=1 // pred_check_branch
      %57 = sbr.rel (0) target = $region25
    $region24: #{tpu_custom_call.1} parent=1 // pred_region
      %s59 = ssub.s32 3072, 3072
      %60 = vsyncadd [#allocation10], %s59
      %s61 = sshll.u32 [#allocation9], 4
      %s62 = int_to_ptr.vmem [resolvable:$true] %s61
      %67 = dma.hbm_to_vmem [thread:$0]  %s5, 3072, %s62, [#allocation10], 64, 64, 4
    $region25: #{tpu_custom_call.1} parent=1 // pred_fallthru
      _
    // Predicated region
    $region26: #{tpu_custom_call.1} parent=1 // pred_check
      _
    $region27: #{tpu_custom_call.1} parent=1 // pred_check_branch
      %69 = sbr.rel (0) target = $region29
    $region28: #{tpu_custom_call.1} parent=1 // pred_region
      _
    $region29: #{tpu_custom_call.1} parent=1 // pred_fallthru
      _
    // Predicated region
    $region30: #{tpu_custom_call.1} parent=1 // pred_check
      _
    $region31: #{tpu_custom_call.1} parent=1 // pred_check_branch
      %71 = sbr.rel (0) target = $region33
    $region32: #{tpu_custom_call.1} parent=1 // pred_region
      _
    $region33: #{tpu_custom_call.1} parent=1 // pred_fallthru
      _
    // Predicated region
    $region34: #{tpu_custom_call.1} parent=1 // pred_check
      _
    $region35: #{tpu_custom_call.1} parent=1 // pred_check_branch
      %73 = sbr.rel (0) target = $region37
    $region36: #{tpu_custom_call.1} parent=1 // pred_region
      %74 = dma.done [#allocation4], 128
    $region37: #{tpu_custom_call.1} parent=1 // pred_fallthru
      _
    // Predicated region
    $region38: #{tpu_custom_call.1} parent=1 // pred_check
      _
    $region39: #{tpu_custom_call.1} parent=1 // pred_check_branch
      %76 = sbr.rel (0) target = $region41
    $region40: #{tpu_custom_call.1} parent=1 // pred_region
      %77 = dma.done [#allocation7], 512
    $region41: #{tpu_custom_call.1} parent=1 // pred_fallthru
      _
    // Predicated region
    $region42: #{tpu_custom_call.1} parent=1 // pred_check
      _
    $region43: #{tpu_custom_call.1} parent=1 // pred_check_branch
      %79 = sbr.rel (0) target = $region45
    $region44: #{tpu_custom_call.1} parent=1 // pred_region
      %80 = dma.done [#allocation7], 12288
    $region45: #{tpu_custom_call.1} parent=1 // pred_fallthru
      _
    // Predicated region
    $region46: #{tpu_custom_call.1} parent=1 // pred_check
      _
    $region47: #{tpu_custom_call.1} parent=1 // pred_check_branch
      %82 = sbr.rel (0) target = $region49
    $region48: #{tpu_custom_call.1} parent=1 // pred_region
      %83 = dma.done [#allocation10], 3072
    $region49: #{tpu_custom_call.1} parent=1 // pred_fallthru
      _
    %v85 = vld [vmem:[#allocation3] sm:$0xff]
    %v86 = vpack.c.bf16 %v85, %v85
    %v87 = vld [vmem:[#allocation6] sm:$0xff]
    %v88 = vld [vmem:[#allocation6 + $0x8] sm:$0xff]
    %v89 = vld [vmem:[#allocation6 + $0x10] sm:$0xff]
    %v90 = vld [vmem:[#allocation6 + $0x18] sm:$0xff]
    %v91 = vld [vmem:[%s2] sm:$0xf]
    %v93 = vlaneseq
    %v94 = vshrl.u32 %v93, 7
    %v95 = vsub.s32 0, %v94
    %v96 = vrot.slane %v91, %v95
    %v97 = vlaneseq
    %v98 = vshrl.u32 %v97, 7
    %v99 = vsub.s32 1, %v98
    %v100 = vrot.slane %v91, %v99
    %v101 = vlaneseq
    %v102 = vshrl.u32 %v101, 7
    %v103 = vsub.s32 2, %v102
    %v104 = vrot.slane %v91, %v103
    %v105 = vlaneseq
    %v106 = vshrl.u32 %v105, 7
    %v107 = vsub.s32 3, %v106
    %v108 = vrot.slane %v91, %v107
    %v117 = vunpack.c.l.b16 %v87
    %v118 = vunpack.c.h.b16 %v87
    %v119 = vunpack.c.l.b16 %v88
    %v120 = vunpack.c.h.b16 %v88
    %v121 = vunpack.c.l.b16 %v89
    %v122 = vunpack.c.h.b16 %v89
    %v123 = vunpack.c.l.b16 %v90
    %v124 = vunpack.c.h.b16 %v90
    %v125 = vpack.c.b16 %v121, %v117
    %v126 = vpack.c.b16 %v122, %v118
    %v127 = vpack.c.b16 %v123, %v119
    %v128 = vpack.c.b16 %v124, %v120
    %vm133 = vcmask 130048
    %v135 = vsel %vm133, %v86, 0
    %137 = vmatprep.subr.bf16.mxu0 %v126
    %138 = vmatpush1.bf16.msra.mxu0 %v125
    %139 = vmatprep.subr.bf16.mxu0 0
    %140 = vmatpush1.bf16.msra.mxu0 0
    %141 = vmatprep.subr.bf16.mxu0 0
    %142 = vmatpush1.bf16.msra.mxu0 0
    %143 = vmatprep.subr.bf16.mxu0 0
    %144 = vmatpush1.bf16.msra.mxu0 0
    %145 = vmatprep.subr.bf16.mxu0 0
    %146 = vmatpush1.bf16.msra.mxu0 0
    %147 = vmatprep.subr.bf16.mxu0 0
    %148 = vmatpush1.bf16.msra.mxu0 0
    %149 = vmatprep.subr.bf16.mxu0 0
    %150 = vmatpush1.bf16.msra.mxu0 0
    %151 = vmatprep.subr.bf16.mxu0 0
    %152 = vmatpush1.bf16.msra.mxu0 0
    %153 = vmatprep.subr.bf16.mxu0 0
    %154 = vmatpush1.bf16.msra.mxu0 0
    %155 = vmatprep.subr.bf16.mxu0 0
    %156 = vmatpush1.bf16.msra.mxu0 0
    %157 = vmatprep.subr.bf16.mxu0 0
    %158 = vmatpush1.bf16.msra.mxu0 0
    %159 = vmatprep.subr.bf16.mxu0 0
    %160 = vmatpush1.bf16.msra.mxu0 0
    %161 = vmatprep.subr.bf16.mxu0 0
    %162 = vmatpush1.bf16.msra.mxu0 0
    %163 = vmatprep.subr.bf16.mxu0 0
    %164 = vmatpush1.bf16.msra.mxu0 0
    %165 = vmatprep.subr.bf16.mxu0 0
    %166 = vmatpush1.bf16.msra.mxu0 0
    %167 = vmatprep.subr.bf16.mxu0 0
    %168 = vmatpush1.bf16.msra.mxu0 0
    %169 = vmatprep.mubr.bf16.mxu0 0
    %170 = vmatmul.mubr.bf16.gmra.mrb[0].mxu0 %v135
    %v171 = vpop.f32.mrb[0].mxu0
    %v172 = vadd.f32 %v96, %v171
    %v173 = vpop.f32.mrb[0].mxu0
    %v174 = vadd.f32 %v100, %v173
    %v175 = vpop.f32.mrb[0].mxu0
    %v176 = vpop.f32.mrb[0].mxu0
    %177 = vdwg.mxu0
    %178 = vmatprep.subr.bf16.mxu0 %v128
    %179 = vmatpush1.bf16.msra.mxu0 %v127
    %180 = vmatprep.subr.bf16.mxu0 0
    %181 = vmatpush1.bf16.msra.mxu0 0
    %182 = vmatprep.subr.bf16.mxu0 0
    %183 = vmatpush1.bf16.msra.mxu0 0
    %184 = vmatprep.subr.bf16.mxu0 0
    %185 = vmatpush1.bf16.msra.mxu0 0
    %186 = vmatprep.subr.bf16.mxu0 0
    %187 = vmatpush1.bf16.msra.mxu0 0
    %188 = vmatprep.subr.bf16.mxu0 0
    %189 = vmatpush1.bf16.msra.mxu0 0
    %190 = vmatprep.subr.bf16.mxu0 0
    %191 = vmatpush1.bf16.msra.mxu0 0
    %192 = vmatprep.subr.bf16.mxu0 0
    %193 = vmatpush1.bf16.msra.mxu0 0
    %194 = vmatprep.subr.bf16.mxu0 0
    %195 = vmatpush1.bf16.msra.mxu0 0
    %196 = vmatprep.subr.bf16.mxu0 0
    %197 = vmatpush1.bf16.msra.mxu0 0
    %198 = vmatprep.subr.bf16.mxu0 0
    %199 = vmatpush1.bf16.msra.mxu0 0
    %200 = vmatprep.subr.bf16.mxu0 0
    %201 = vmatpush1.bf16.msra.mxu0 0
    %202 = vmatprep.subr.bf16.mxu0 0
    %203 = vmatpush1.bf16.msra.mxu0 0
    %204 = vmatprep.subr.bf16.mxu0 0
    %205 = vmatpush1.bf16.msra.mxu0 0
    %206 = vmatprep.subr.bf16.mxu0 0
    %207 = vmatpush1.bf16.msra.mxu0 0
    %208 = vmatprep.subr.bf16.mxu0 0
    %209 = vmatpush1.bf16.msra.mxu0 0
    %210 = vmatprep.mubr.bf16.mxu0 0
    %211 = vmatmul.mubr.bf16.gmra.mrb[0].mxu0 %v135
    %v212 = vpop.f32.mrb[0].mxu0
    %v213 = vadd.f32 %v104, %v212
    %v214 = vpop.f32.mrb[0].mxu0
    %v215 = vadd.f32 %v108, %v214
    %v216 = vpop.f32.mrb[0].mxu0
    %v217 = vpop.f32.mrb[0].mxu0
    %218 = vdwg.mxu0
    %v219 = vmax.f32 %v172, 0.0
    %v220 = vmax.f32 %v174, 0.0
    %v221 = vmax.f32 %v213, 0.0
    %v222 = vmax.f32 %v215, 0.0
    %v223 = vpack.c.bf16 %v219, %v219
    %v224 = vpack.c.bf16 %v220, %v220
    %v225 = vpack.c.bf16 %v221, %v221
    %v226 = vpack.c.bf16 %v222, %v222
    %v227 = vld [vmem:[#allocation8] sm:$0xff]
    %v228 = vld [vmem:[#allocation8 + $0x8] sm:$0xf]
    %v229 = vld [vmem:[#allocation8 + $0xc] sm:$0xff]
    %v230 = vld [vmem:[#allocation8 + $0x14] sm:$0xf]
    %v231 = vld [vmem:[#allocation8 + $0x18] sm:$0xff]
    %v232 = vld [vmem:[#allocation8 + $0x20] sm:$0xf]
    %v233 = vld [vmem:[#allocation8 + $0x24] sm:$0xff]
    %v234 = vld [vmem:[#allocation8 + $0x2c] sm:$0xf]
    %v235 = vld [vmem:[#allocation8 + $0x30] sm:$0xff]
    %v236 = vld [vmem:[#allocation8 + $0x38] sm:$0xf]
    %v237 = vld [vmem:[#allocation8 + $0x3c] sm:$0xff]
    %v238 = vld [vmem:[#allocation8 + $0x44] sm:$0xf]
    %v239 = vld [vmem:[#allocation8 + $0x48] sm:$0xff]
    %v240 = vld [vmem:[#allocation8 + $0x50] sm:$0xf]
    %v241 = vld [vmem:[#allocation8 + $0x54] sm:$0xff]
    %v242 = vld [vmem:[#allocation8 + $0x5c] sm:$0xf]
    %v243 = vld [vmem:[#allocation8 + $0x60] sm:$0xff]
    %v244 = vld [vmem:[#allocation8 + $0x68] sm:$0xf]
    %v245 = vld [vmem:[#allocation8 + $0x6c] sm:$0xff]
    %v246 = vld [vmem:[#allocation8 + $0x74] sm:$0xf]
    %v247 = vld [vmem:[#allocation8 + $0x78] sm:$0xff]
    %v248 = vld [vmem:[#allocation8 + $0x80] sm:$0xf]
    %v249 = vld [vmem:[#allocation8 + $0x84] sm:$0xff]
    %v250 = vld [vmem:[#allocation8 + $0x8c] sm:$0xf]
    %v251 = vld [vmem:[#allocation8 + $0x90] sm:$0xff]
    %v252 = vld [vmem:[#allocation8 + $0x98] sm:$0xf]
    %v253 = vld [vmem:[#allocation8 + $0x9c] sm:$0xff]
    %v254 = vld [vmem:[#allocation8 + $0xa4] sm:$0xf]
    %v255 = vld [vmem:[#allocation8 + $0xa8] sm:$0xff]
    %v256 = vld [vmem:[#allocation8 + $0xb0] sm:$0xf]
    %v257 = vld [vmem:[#allocation8 + $0xb4] sm:$0xff]
    %v258 = vld [vmem:[#allocation8 + $0xbc] sm:$0xf]
    %v259 = vld [vmem:[#allocation8 + $0xc0] sm:$0xff]
    %v260 = vld [vmem:[#allocation8 + $0xc8] sm:$0xf]
    %v261 = vld [vmem:[#allocation8 + $0xcc] sm:$0xff]
    %v262 = vld [vmem:[#allocation8 + $0xd4] sm:$0xf]
    %v263 = vld [vmem:[#allocation8 + $0xd8] sm:$0xff]
    %v264 = vld [vmem:[#allocation8 + $0xe0] sm:$0xf]
    %v265 = vld [vmem:[#allocation8 + $0xe4] sm:$0xff]
    %v266 = vld [vmem:[#allocation8 + $0xec] sm:$0xf]
    %v267 = vld [vmem:[#allocation8 + $0xf0] sm:$0xff]
    %v268 = vld [vmem:[#allocation8 + $0xf8] sm:$0xf]
    %v269 = vld [vmem:[#allocation8 + $0xfc] sm:$0xff]
    %v270 = vld [vmem:[#allocation8 + $0x104] sm:$0xf]
    %v271 = vld [vmem:[#allocation8 + $0x108] sm:$0xff]
    %v272 = vld [vmem:[#allocation8 + $0x110] sm:$0xf]
    %v273 = vld [vmem:[#allocation8 + $0x114] sm:$0xff]
    %v274 = vld [vmem:[#allocation8 + $0x11c] sm:$0xf]
    %v275 = vld [vmem:[#allocation8 + $0x120] sm:$0xff]
    %v276 = vld [vmem:[#allocation8 + $0x128] sm:$0xf]
    %v277 = vld [vmem:[#allocation8 + $0x12c] sm:$0xff]
    %v278 = vld [vmem:[#allocation8 + $0x134] sm:$0xf]
    %v279 = vld [vmem:[#allocation8 + $0x138] sm:$0xff]
    %v280 = vld [vmem:[#allocation8 + $0x140] sm:$0xf]
    %v281 = vld [vmem:[#allocation8 + $0x144] sm:$0xff]
    %v282 = vld [vmem:[#allocation8 + $0x14c] sm:$0xf]
    %v283 = vld [vmem:[#allocation8 + $0x150] sm:$0xff]
    %v284 = vld [vmem:[#allocation8 + $0x158] sm:$0xf]
    %v285 = vld [vmem:[#allocation8 + $0x15c] sm:$0xff]
    %v286 = vld [vmem:[#allocation8 + $0x164] sm:$0xf]
    %v287 = vld [vmem:[#allocation8 + $0x168] sm:$0xff]
    %v288 = vld [vmem:[#allocation8 + $0x170] sm:$0xf]
    %v289 = vld [vmem:[#allocation8 + $0x174] sm:$0xff]
    %v290 = vld [vmem:[#allocation8 + $0x17c] sm:$0xf]
    %v291 = vld [vmem:[#allocation8 + $0x180] sm:$0xff]
    %v292 = vld [vmem:[#allocation8 + $0x188] sm:$0xf]
    %v293 = vld [vmem:[#allocation8 + $0x18c] sm:$0xff]
    %v294 = vld [vmem:[#allocation8 + $0x194] sm:$0xf]
    %v295 = vld [vmem:[#allocation8 + $0x198] sm:$0xff]
    %v296 = vld [vmem:[#allocation8 + $0x1a0] sm:$0xf]
    %v297 = vld [vmem:[#allocation8 + $0x1a4] sm:$0xff]
    %v298 = vld [vmem:[#allocation8 + $0x1ac] sm:$0xf]
    %v299 = vld [vmem:[#allocation8 + $0x1b0] sm:$0xff]
    %v300 = vld [vmem:[#allocation8 + $0x1b8] sm:$0xf]
    %v301 = vld [vmem:[#allocation8 + $0x1bc] sm:$0xff]
    %v302 = vld [vmem:[#allocation8 + $0x1c4] sm:$0xf]
    %v303 = vld [vmem:[#allocation8 + $0x1c8] sm:$0xff]
    %v304 = vld [vmem:[#allocation8 + $0x1d0] sm:$0xf]
    %v305 = vld [vmem:[#allocation8 + $0x1d4] sm:$0xff]
    %v306 = vld [vmem:[#allocation8 + $0x1dc] sm:$0xf]
    %v307 = vld [vmem:[#allocation8 + $0x1e0] sm:$0xff]
    %v308 = vld [vmem:[#allocation8 + $0x1e8] sm:$0xf]
    %v309 = vld [vmem:[#allocation8 + $0x1ec] sm:$0xff]
    %v310 = vld [vmem:[#allocation8 + $0x1f4] sm:$0xf]
    %v311 = vld [vmem:[#allocation8 + $0x1f8] sm:$0xff]
    %v312 = vld [vmem:[#allocation8 + $0x200] sm:$0xf]
    %v313 = vld [vmem:[#allocation8 + $0x204] sm:$0xff]
    %v314 = vld [vmem:[#allocation8 + $0x20c] sm:$0xf]
    %v315 = vld [vmem:[#allocation8 + $0x210] sm:$0xff]
    %v316 = vld [vmem:[#allocation8 + $0x218] sm:$0xf]
    %v317 = vld [vmem:[#allocation8 + $0x21c] sm:$0xff]
    %v318 = vld [vmem:[#allocation8 + $0x224] sm:$0xf]
    %v319 = vld [vmem:[#allocation8 + $0x228] sm:$0xff]
    %v320 = vld [vmem:[#allocation8 + $0x230] sm:$0xf]
    %v321 = vld [vmem:[#allocation8 + $0x234] sm:$0xff]
    %v322 = vld [vmem:[#allocation8 + $0x23c] sm:$0xf]
    %v323 = vld [vmem:[#allocation8 + $0x240] sm:$0xff]
    %v324 = vld [vmem:[#allocation8 + $0x248] sm:$0xf]
    %v325 = vld [vmem:[#allocation8 + $0x24c] sm:$0xff]
    %v326 = vld [vmem:[#allocation8 + $0x254] sm:$0xf]
    %v327 = vld [vmem:[#allocation8 + $0x258] sm:$0xff]
    %v328 = vld [vmem:[#allocation8 + $0x260] sm:$0xf]
    %v329 = vld [vmem:[#allocation8 + $0x264] sm:$0xff]
    %v330 = vld [vmem:[#allocation8 + $0x26c] sm:$0xf]
    %v331 = vld [vmem:[#allocation8 + $0x270] sm:$0xff]
    %v332 = vld [vmem:[#allocation8 + $0x278] sm:$0xf]
    %v333 = vld [vmem:[#allocation8 + $0x27c] sm:$0xff]
    %v334 = vld [vmem:[#allocation8 + $0x284] sm:$0xf]
    %v335 = vld [vmem:[#allocation8 + $0x288] sm:$0xff]
    %v336 = vld [vmem:[#allocation8 + $0x290] sm:$0xf]
    %v337 = vld [vmem:[#allocation8 + $0x294] sm:$0xff]
    %v338 = vld [vmem:[#allocation8 + $0x29c] sm:$0xf]
    %v339 = vld [vmem:[#allocation8 + $0x2a0] sm:$0xff]
    %v340 = vld [vmem:[#allocation8 + $0x2a8] sm:$0xf]
    %v341 = vld [vmem:[#allocation8 + $0x2ac] sm:$0xff]
    %v342 = vld [vmem:[#allocation8 + $0x2b4] sm:$0xf]
    %v343 = vld [vmem:[#allocation8 + $0x2b8] sm:$0xff]
    %v344 = vld [vmem:[#allocation8 + $0x2c0] sm:$0xf]
    %v345 = vld [vmem:[#allocation8 + $0x2c4] sm:$0xff]
    %v346 = vld [vmem:[#allocation8 + $0x2cc] sm:$0xf]
    %v347 = vld [vmem:[#allocation8 + $0x2d0] sm:$0xff]
    %v348 = vld [vmem:[#allocation8 + $0x2d8] sm:$0xf]
    %v349 = vld [vmem:[#allocation8 + $0x2dc] sm:$0xff]
    %v350 = vld [vmem:[#allocation8 + $0x2e4] sm:$0xf]
    %v351 = vld [vmem:[#allocation8 + $0x2e8] sm:$0xff]
    %v352 = vld [vmem:[#allocation8 + $0x2f0] sm:$0xf]
    %v353 = vld [vmem:[#allocation8 + $0x2f4] sm:$0xff]
    %v354 = vld [vmem:[#allocation8 + $0x2fc] sm:$0xf]
    %v355 = vld [vmem:[%s4] sm:$0x7]
    %v357 = vlaneseq
    %v358 = vshrl.u32 %v357, 7
    %v359 = vsub.s32 0, %v358
    %v360 = vrot.slane %v355, %v359
    %v361 = vlaneseq
    %v362 = vshrl.u32 %v361, 7
    %v363 = vsub.s32 1, %v362
    %v364 = vrot.slane %v355, %v363
    %v365 = vlaneseq
    %v366 = vshrl.u32 %v365, 7
    %v367 = vsub.s32 2, %v366
    %v368 = vrot.slane %v355, %v367
    %v500 = vunpack.c.l.b16 %v227
    %v501 = vunpack.c.h.b16 %v227
    %v502 = vunpack.c.l.b16 %v228
    %v503 = vunpack.c.l.b16 %v229
    %v504 = vunpack.c.h.b16 %v229
    %v505 = vunpack.c.l.b16 %v230
    %v506 = vunpack.c.l.b16 %v231
    %v507 = vunpack.c.h.b16 %v231
    %v508 = vunpack.c.l.b16 %v232
    %v509 = vunpack.c.l.b16 %v233
    %v510 = vunpack.c.h.b16 %v233
    %v511 = vunpack.c.l.b16 %v234
    %v512 = vunpack.c.l.b16 %v235
    %v513 = vunpack.c.h.b16 %v235
    %v514 = vunpack.c.l.b16 %v236
    %v515 = vunpack.c.l.b16 %v237
    %v516 = vunpack.c.h.b16 %v237
    %v517 = vunpack.c.l.b16 %v238
    %v518 = vunpack.c.l.b16 %v239
    %v519 = vunpack.c.h.b16 %v239
    %v520 = vunpack.c.l.b16 %v240
    %v521 = vunpack.c.l.b16 %v241
    %v522 = vunpack.c.h.b16 %v241
    %v523 = vunpack.c.l.b16 %v242
    %v524 = vunpack.c.l.b16 %v243
    %v525 = vunpack.c.h.b16 %v243
    %v526 = vunpack.c.l.b16 %v244
    %v527 = vunpack.c.l.b16 %v245
    %v528 = vunpack.c.h.b16 %v245
    %v529 = vunpack.c.l.b16 %v246
    %v530 = vunpack.c.l.b16 %v247
    %v531 = vunpack.c.h.b16 %v247
    %v532 = vunpack.c.l.b16 %v248
    %v533 = vunpack.c.l.b16 %v249
    %v534 = vunpack.c.h.b16 %v249
    %v535 = vunpack.c.l.b16 %v250
    %v536 = vunpack.c.l.b16 %v251
    %v537 = vunpack.c.h.b16 %v251
    %v538 = vunpack.c.l.b16 %v252
    %v539 = vunpack.c.l.b16 %v253
    %v540 = vunpack.c.h.b16 %v253
    %v541 = vunpack.c.l.b16 %v254
    %v542 = vunpack.c.l.b16 %v255
    %v543 = vunpack.c.h.b16 %v255
    %v544 = vunpack.c.l.b16 %v256
    %v545 = vunpack.c.l.b16 %v257
    %v546 = vunpack.c.h.b16 %v257
    %v547 = vunpack.c.l.b16 %v258
    %v548 = vunpack.c.l.b16 %v259
    %v549 = vunpack.c.h.b16 %v259
    %v550 = vunpack.c.l.b16 %v260
    %v551 = vunpack.c.l.b16 %v261
    %v552 = vunpack.c.h.b16 %v261
    %v553 = vunpack.c.l.b16 %v262
    %v554 = vunpack.c.l.b16 %v263
    %v555 = vunpack.c.h.b16 %v263
    %v556 = vunpack.c.l.b16 %v264
    %v557 = vunpack.c.l.b16 %v265
    %v558 = vunpack.c.h.b16 %v265
    %v559 = vunpack.c.l.b16 %v266
    %v560 = vunpack.c.l.b16 %v267
    %v561 = vunpack.c.h.b16 %v267
    %v562 = vunpack.c.l.b16 %v268
    %v563 = vunpack.c.l.b16 %v269
    %v564 = vunpack.c.h.b16 %v269
    %v565 = vunpack.c.l.b16 %v270
    %v566 = vunpack.c.l.b16 %v271
    %v567 = vunpack.c.h.b16 %v271
    %v568 = vunpack.c.l.b16 %v272
    %v569 = vunpack.c.l.b16 %v273
    %v570 = vunpack.c.h.b16 %v273
    %v571 = vunpack.c.l.b16 %v274
    %v572 = vunpack.c.l.b16 %v275
    %v573 = vunpack.c.h.b16 %v275
    %v574 = vunpack.c.l.b16 %v276
    %v575 = vunpack.c.l.b16 %v277
    %v576 = vunpack.c.h.b16 %v277
    %v577 = vunpack.c.l.b16 %v278
    %v578 = vunpack.c.l.b16 %v279
    %v579 = vunpack.c.h.b16 %v279
    %v580 = vunpack.c.l.b16 %v280
    %v581 = vunpack.c.l.b16 %v281
    %v582 = vunpack.c.h.b16 %v281
    %v583 = vunpack.c.l.b16 %v282
    %v584 = vunpack.c.l.b16 %v283
    %v585 = vunpack.c.h.b16 %v283
    %v586 = vunpack.c.l.b16 %v284
    %v587 = vunpack.c.l.b16 %v285
    %v588 = vunpack.c.h.b16 %v285
    %v589 = vunpack.c.l.b16 %v286
    %v590 = vunpack.c.l.b16 %v287
    %v591 = vunpack.c.h.b16 %v287
    %v592 = vunpack.c.l.b16 %v288
    %v593 = vunpack.c.l.b16 %v289
    %v594 = vunpack.c.h.b16 %v289
    %v595 = vunpack.c.l.b16 %v290
    %v596 = vunpack.c.l.b16 %v291
    %v597 = vunpack.c.h.b16 %v291
    %v598 = vunpack.c.l.b16 %v292
    %v599 = vunpack.c.l.b16 %v293
    %v600 = vunpack.c.h.b16 %v293
    %v601 = vunpack.c.l.b16 %v294
    %v602 = vunpack.c.l.b16 %v295
    %v603 = vunpack.c.h.b16 %v295
    %v604 = vunpack.c.l.b16 %v296
    %v605 = vunpack.c.l.b16 %v297
    %v606 = vunpack.c.h.b16 %v297
    %v607 = vunpack.c.l.b16 %v298
    %v608 = vunpack.c.l.b16 %v299
    %v609 = vunpack.c.h.b16 %v299
    %v610 = vunpack.c.l.b16 %v300
    %v611 = vunpack.c.l.b16 %v301
    %v612 = vunpack.c.h.b16 %v301
    %v613 = vunpack.c.l.b16 %v302
    %v614 = vunpack.c.l.b16 %v303
    %v615 = vunpack.c.h.b16 %v303
    %v616 = vunpack.c.l.b16 %v304
    %v617 = vunpack.c.l.b16 %v305
    %v618 = vunpack.c.h.b16 %v305
    %v619 = vunpack.c.l.b16 %v306
    %v620 = vunpack.c.l.b16 %v307
    %v621 = vunpack.c.h.b16 %v307
    %v622 = vunpack.c.l.b16 %v308
    %v623 = vunpack.c.l.b16 %v309
    %v624 = vunpack.c.h.b16 %v309
    %v625 = vunpack.c.l.b16 %v310
    %v626 = vunpack.c.l.b16 %v311
    %v627 = vunpack.c.h.b16 %v311
    %v628 = vunpack.c.l.b16 %v312
    %v629 = vunpack.c.l.b16 %v313
    %v630 = vunpack.c.h.b16 %v313
    %v631 = vunpack.c.l.b16 %v314
    %v632 = vunpack.c.l.b16 %v315
    %v633 = vunpack.c.h.b16 %v315
    %v634 = vunpack.c.l.b16 %v316
    %v635 = vunpack.c.l.b16 %v317
    %v636 = vunpack.c.h.b16 %v317
    %v637 = vunpack.c.l.b16 %v318
    %v638 = vunpack.c.l.b16 %v319
    %v639 = vunpack.c.h.b16 %v319
    %v640 = vunpack.c.l.b16 %v320
    %v641 = vunpack.c.l.b16 %v321
    %v642 = vunpack.c.h.b16 %v321
    %v643 = vunpack.c.l.b16 %v322
    %v644 = vunpack.c.l.b16 %v323
    %v645 = vunpack.c.h.b16 %v323
    %v646 = vunpack.c.l.b16 %v324
    %v647 = vunpack.c.l.b16 %v325
    %v648 = vunpack.c.h.b16 %v325
    %v649 = vunpack.c.l.b16 %v326
    %v650 = vunpack.c.l.b16 %v327
    %v651 = vunpack.c.h.b16 %v327
    %v652 = vunpack.c.l.b16 %v328
    %v653 = vunpack.c.l.b16 %v329
    %v654 = vunpack.c.h.b16 %v329
    %v655 = vunpack.c.l.b16 %v330
    %v656 = vunpack.c.l.b16 %v331
    %v657 = vunpack.c.h.b16 %v331
    %v658 = vunpack.c.l.b16 %v332
    %v659 = vunpack.c.l.b16 %v333
    %v660 = vunpack.c.h.b16 %v333
    %v661 = vunpack.c.l.b16 %v334
    %v662 = vunpack.c.l.b16 %v335
    %v663 = vunpack.c.h.b16 %v335
    %v664 = vunpack.c.l.b16 %v336
    %v665 = vunpack.c.l.b16 %v337
    %v666 = vunpack.c.h.b16 %v337
    %v667 = vunpack.c.l.b16 %v338
    %v668 = vunpack.c.l.b16 %v339
    %v669 = vunpack.c.h.b16 %v339
    %v670 = vunpack.c.l.b16 %v340
    %v671 = vunpack.c.l.b16 %v341
    %v672 = vunpack.c.h.b16 %v341
    %v673 = vunpack.c.l.b16 %v342
    %v674 = vunpack.c.l.b16 %v343
    %v675 = vunpack.c.h.b16 %v343
    %v676 = vunpack.c.l.b16 %v344
    %v677 = vunpack.c.l.b16 %v345
    %v678 = vunpack.c.h.b16 %v345
    %v679 = vunpack.c.l.b16 %v346
    %v680 = vunpack.c.l.b16 %v347
    %v681 = vunpack.c.h.b16 %v347
    %v682 = vunpack.c.l.b16 %v348
    %v683 = vunpack.c.l.b16 %v349
    %v684 = vunpack.c.h.b16 %v349
    %v685 = vunpack.c.l.b16 %v350
    %v686 = vunpack.c.l.b16 %v351
    %v687 = vunpack.c.h.b16 %v351
    %v688 = vunpack.c.l.b16 %v352
    %v689 = vunpack.c.l.b16 %v353
    %v690 = vunpack.c.h.b16 %v353
    %v691 = vunpack.c.l.b16 %v354
    %v692 = vpack.c.b16 %v503, %v500
    %v693 = vpack.c.b16 %v504, %v501
    %v694 = vpack.c.b16 %v505, %v502
    %v695 = vpack.c.b16 %v509, %v506
    %v696 = vpack.c.b16 %v510, %v507
    %v697 = vpack.c.b16 %v511, %v508
    %v698 = vpack.c.b16 %v515, %v512
    %v699 = vpack.c.b16 %v516, %v513
    %v700 = vpack.c.b16 %v517, %v514
    %v701 = vpack.c.b16 %v521, %v518
    %v702 = vpack.c.b16 %v522, %v519
    %v703 = vpack.c.b16 %v523, %v520
    %v704 = vpack.c.b16 %v527, %v524
    %v705 = vpack.c.b16 %v528, %v525
    %v706 = vpack.c.b16 %v529, %v526
    %v707 = vpack.c.b16 %v533, %v530
    %v708 = vpack.c.b16 %v534, %v531
    %v709 = vpack.c.b16 %v535, %v532
    %v710 = vpack.c.b16 %v539, %v536
    %v711 = vpack.c.b16 %v540, %v537
    %v712 = vpack.c.b16 %v541, %v538
    %v713 = vpack.c.b16 %v545, %v542
    %v714 = vpack.c.b16 %v546, %v543
    %v715 = vpack.c.b16 %v547, %v544
    %v716 = vpack.c.b16 %v551, %v548
    %v717 = vpack.c.b16 %v552, %v549
    %v718 = vpack.c.b16 %v553, %v550
    %v719 = vpack.c.b16 %v557, %v554
    %v720 = vpack.c.b16 %v558, %v555
    %v721 = vpack.c.b16 %v559, %v556
    %v722 = vpack.c.b16 %v563, %v560
    %v723 = vpack.c.b16 %v564, %v561
    %v724 = vpack.c.b16 %v565, %v562
    %v725 = vpack.c.b16 %v569, %v566
    %v726 = vpack.c.b16 %v570, %v567
    %v727 = vpack.c.b16 %v571, %v568
    %v728 = vpack.c.b16 %v575, %v572
    %v729 = vpack.c.b16 %v576, %v573
    %v730 = vpack.c.b16 %v577, %v574
    %v731 = vpack.c.b16 %v581, %v578
    %v732 = vpack.c.b16 %v582, %v579
    %v733 = vpack.c.b16 %v583, %v580
    %v734 = vpack.c.b16 %v587, %v584
    %v735 = vpack.c.b16 %v588, %v585
    %v736 = vpack.c.b16 %v589, %v586
    %v737 = vpack.c.b16 %v593, %v590
    %v738 = vpack.c.b16 %v594, %v591
    %v739 = vpack.c.b16 %v595, %v592
    %v740 = vpack.c.b16 %v599, %v596
    %v741 = vpack.c.b16 %v600, %v597
    %v742 = vpack.c.b16 %v601, %v598
    %v743 = vpack.c.b16 %v605, %v602
    %v744 = vpack.c.b16 %v606, %v603
    %v745 = vpack.c.b16 %v607, %v604
    %v746 = vpack.c.b16 %v611, %v608
    %v747 = vpack.c.b16 %v612, %v609
    %v748 = vpack.c.b16 %v613, %v610
    %v749 = vpack.c.b16 %v617, %v614
    %v750 = vpack.c.b16 %v618, %v615
    %v751 = vpack.c.b16 %v619, %v616
    %v752 = vpack.c.b16 %v623, %v620
    %v753 = vpack.c.b16 %v624, %v621
    %v754 = vpack.c.b16 %v625, %v622
    %v755 = vpack.c.b16 %v629, %v626
    %v756 = vpack.c.b16 %v630, %v627
    %v757 = vpack.c.b16 %v631, %v628
    %v758 = vpack.c.b16 %v635, %v632
    %v759 = vpack.c.b16 %v636, %v633
    %v760 = vpack.c.b16 %v637, %v634
    %v761 = vpack.c.b16 %v641, %v638
    %v762 = vpack.c.b16 %v642, %v639
    %v763 = vpack.c.b16 %v643, %v640
    %v764 = vpack.c.b16 %v647, %v644
    %v765 = vpack.c.b16 %v648, %v645
    %v766 = vpack.c.b16 %v649, %v646
    %v767 = vpack.c.b16 %v653, %v650
    %v768 = vpack.c.b16 %v654, %v651
    %v769 = vpack.c.b16 %v655, %v652
    %v770 = vpack.c.b16 %v659, %v656
    %v771 = vpack.c.b16 %v660, %v657
    %v772 = vpack.c.b16 %v661, %v658
    %v773 = vpack.c.b16 %v665, %v662
    %v774 = vpack.c.b16 %v666, %v663
    %v775 = vpack.c.b16 %v667, %v664
    %v776 = vpack.c.b16 %v671, %v668
    %v777 = vpack.c.b16 %v672, %v669
    %v778 = vpack.c.b16 %v673, %v670
    %v779 = vpack.c.b16 %v677, %v674
    %v780 = vpack.c.b16 %v678, %v675
    %v781 = vpack.c.b16 %v679, %v676
    %v782 = vpack.c.b16 %v683, %v680
    %v783 = vpack.c.b16 %v684, %v681
    %v784 = vpack.c.b16 %v685, %v682
    %v785 = vpack.c.b16 %v689, %v686
    %v786 = vpack.c.b16 %v690, %v687
    %v787 = vpack.c.b16 %v691, %v688
    %884 = vmatprep.subr.bf16.mxu0 %v693
    %885 = vmatpush1.bf16.msra.mxu0 %v692
    %886 = vmatprep.subr.bf16.mxu0 %v696
    %887 = vmatpush1.bf16.msra.mxu0 %v695
    %888 = vmatprep.subr.bf16.mxu0 %v699
    %889 = vmatpush1.bf16.msra.mxu0 %v698
    %890 = vmatprep.subr.bf16.mxu0 %v702
    %891 = vmatpush1.bf16.msra.mxu0 %v701
    %892 = vmatprep.subr.bf16.mxu0 %v705
    %893 = vmatpush1.bf16.msra.mxu0 %v704
    %894 = vmatprep.subr.bf16.mxu0 %v708
    %895 = vmatpush1.bf16.msra.mxu0 %v707
    %896 = vmatprep.subr.bf16.mxu0 %v711
    %897 = vmatpush1.bf16.msra.mxu0 %v710
    %898 = vmatprep.subr.bf16.mxu0 %v714
    %899 = vmatpush1.bf16.msra.mxu0 %v713
    %900 = vmatprep.subr.bf16.mxu0 %v717
    %901 = vmatpush1.bf16.msra.mxu0 %v716
    %902 = vmatprep.subr.bf16.mxu0 %v720
    %903 = vmatpush1.bf16.msra.mxu0 %v719
    %904 = vmatprep.subr.bf16.mxu0 %v723
    %905 = vmatpush1.bf16.msra.mxu0 %v722
    %906 = vmatprep.subr.bf16.mxu0 %v726
    %907 = vmatpush1.bf16.msra.mxu0 %v725
    %908 = vmatprep.subr.bf16.mxu0 %v729
    %909 = vmatpush1.bf16.msra.mxu0 %v728
    %910 = vmatprep.subr.bf16.mxu0 %v732
    %911 = vmatpush1.bf16.msra.mxu0 %v731
    %912 = vmatprep.subr.bf16.mxu0 %v735
    %913 = vmatpush1.bf16.msra.mxu0 %v734
    %914 = vmatprep.subr.bf16.mxu0 %v738
    %915 = vmatpush1.bf16.msra.mxu0 %v737
    %916 = vmatprep.mubr.bf16.mxu0 %v224
    %917 = vmatmul.mubr.bf16.gmra.mrb[0].mxu0 %v223
    %v918 = vpop.f32.mrb[0].mxu0
    %v919 = vadd.f32 %v360, %v918
    %v920 = vpop.f32.mrb[0].mxu0
    %v921 = vadd.f32 %v364, %v920
    %v922 = vpop.f32.mrb[0].mxu0
    %v923 = vpop.f32.mrb[0].mxu0
    %924 = vdwg.mxu0
    %925 = vmatprep.subr.bf16.mxu0 %v741
    %926 = vmatpush1.bf16.msra.mxu0 %v740
    %927 = vmatprep.subr.bf16.mxu0 %v744
    %928 = vmatpush1.bf16.msra.mxu0 %v743
    %929 = vmatprep.subr.bf16.mxu0 %v747
    %930 = vmatpush1.bf16.msra.mxu0 %v746
    %931 = vmatprep.subr.bf16.mxu0 %v750
    %932 = vmatpush1.bf16.msra.mxu0 %v749
    %933 = vmatprep.subr.bf16.mxu0 %v753
    %934 = vmatpush1.bf16.msra.mxu0 %v752
    %935 = vmatprep.subr.bf16.mxu0 %v756
    %936 = vmatpush1.bf16.msra.mxu0 %v755
    %937 = vmatprep.subr.bf16.mxu0 %v759
    %938 = vmatpush1.bf16.msra.mxu0 %v758
    %939 = vmatprep.subr.bf16.mxu0 %v762
    %940 = vmatpush1.bf16.msra.mxu0 %v761
    %941 = vmatprep.subr.bf16.mxu0 %v765
    %942 = vmatpush1.bf16.msra.mxu0 %v764
    %943 = vmatprep.subr.bf16.mxu0 %v768
    %944 = vmatpush1.bf16.msra.mxu0 %v767
    %945 = vmatprep.subr.bf16.mxu0 %v771
    %946 = vmatpush1.bf16.msra.mxu0 %v770
    %947 = vmatprep.subr.bf16.mxu0 %v774
    %948 = vmatpush1.bf16.msra.mxu0 %v773
    %949 = vmatprep.subr.bf16.mxu0 %v777
    %950 = vmatpush1.bf16.msra.mxu0 %v776
    %951 = vmatprep.subr.bf16.mxu0 %v780
    %952 = vmatpush1.bf16.msra.mxu0 %v779
    %953 = vmatprep.subr.bf16.mxu0 %v783
    %954 = vmatpush1.bf16.msra.mxu0 %v782
    %955 = vmatprep.subr.bf16.mxu0 %v786
    %956 = vmatpush1.bf16.msra.mxu0 %v785
    %957 = vmatprep.mubr.bf16.mxu0 %v226
    %958 = vmatmul.mubr.bf16.gmra.mrb[0].mxu0 %v225
    %v959 = vpop.f32.mrb[0].mxu0
    %v960 = vadd.f32 %v919, %v959
    %v961 = vpop.f32.mrb[0].mxu0
    %v962 = vadd.f32 %v921, %v961
    %v963 = vpop.f32.mrb[0].mxu0
    %v964 = vpop.f32.mrb[0].mxu0
    %965 = vdwg.mxu0
    %966 = vmatprep.subr.bf16.mxu0 0
    %967 = vmatpush1.bf16.msra.mxu0 %v694
    %968 = vmatprep.subr.bf16.mxu0 0
    %969 = vmatpush1.bf16.msra.mxu0 %v697
    %970 = vmatprep.subr.bf16.mxu0 0
    %971 = vmatpush1.bf16.msra.mxu0 %v700
    %972 = vmatprep.subr.bf16.mxu0 0
    %973 = vmatpush1.bf16.msra.mxu0 %v703
    %974 = vmatprep.subr.bf16.mxu0 0
    %975 = vmatpush1.bf16.msra.mxu0 %v706
    %976 = vmatprep.subr.bf16.mxu0 0
    %977 = vmatpush1.bf16.msra.mxu0 %v709
    %978 = vmatprep.subr.bf16.mxu0 0
    %979 = vmatpush1.bf16.msra.mxu0 %v712
    %980 = vmatprep.subr.bf16.mxu0 0
    %981 = vmatpush1.bf16.msra.mxu0 %v715
    %982 = vmatprep.subr.bf16.mxu0 0
    %983 = vmatpush1.bf16.msra.mxu0 %v718
    %984 = vmatprep.subr.bf16.mxu0 0
    %985 = vmatpush1.bf16.msra.mxu0 %v721
    %986 = vmatprep.subr.bf16.mxu0 0
    %987 = vmatpush1.bf16.msra.mxu0 %v724
    %988 = vmatprep.subr.bf16.mxu0 0
    %989 = vmatpush1.bf16.msra.mxu0 %v727
    %990 = vmatprep.subr.bf16.mxu0 0
    %991 = vmatpush1.bf16.msra.mxu0 %v730
    %992 = vmatprep.subr.bf16.mxu0 0
    %993 = vmatpush1.bf16.msra.mxu0 %v733
    %994 = vmatprep.subr.bf16.mxu0 0
    %995 = vmatpush1.bf16.msra.mxu0 %v736
    %996 = vmatprep.subr.bf16.mxu0 0
    %997 = vmatpush1.bf16.msra.mxu0 %v739
    %998 = vmatprep.mubr.bf16.mxu0 %v224
    %999 = vmatmul.mubr.bf16.gmra.mrb[0].mxu0 %v223
    %v1000 = vpop.f32.mrb[0].mxu0
    %v1001 = vadd.f32 %v368, %v1000
    %v1002 = vpop.f32.mrb[0].mxu0
    %v1003 = vpop.f32.mrb[0].mxu0
    %v1004 = vpop.f32.mrb[0].mxu0
    %1005 = vdwg.mxu0
    %1006 = vmatprep.subr.bf16.mxu0 0
    %1007 = vmatpush1.bf16.msra.mxu0 %v742
    %1008 = vmatprep.subr.bf16.mxu0 0
    %1009 = vmatpush1.bf16.msra.mxu0 %v745
    %1010 = vmatprep.subr.bf16.mxu0 0
    %1011 = vmatpush1.bf16.msra.mxu0 %v748
    %1012 = vmatprep.subr.bf16.mxu0 0
    %1013 = vmatpush1.bf16.msra.mxu0 %v751
    %1014 = vmatprep.subr.bf16.mxu0 0
    %1015 = vmatpush1.bf16.msra.mxu0 %v754
    %1016 = vmatprep.subr.bf16.mxu0 0
    %1017 = vmatpush1.bf16.msra.mxu0 %v757
    %1018 = vmatprep.subr.bf16.mxu0 0
    %1019 = vmatpush1.bf16.msra.mxu0 %v760
    %1020 = vmatprep.subr.bf16.mxu0 0
    %1021 = vmatpush1.bf16.msra.mxu0 %v763
    %1022 = vmatprep.subr.bf16.mxu0 0
    %1023 = vmatpush1.bf16.msra.mxu0 %v766
    %1024 = vmatprep.subr.bf16.mxu0 0
    %1025 = vmatpush1.bf16.msra.mxu0 %v769
    %1026 = vmatprep.subr.bf16.mxu0 0
    %1027 = vmatpush1.bf16.msra.mxu0 %v772
    %1028 = vmatprep.subr.bf16.mxu0 0
    %1029 = vmatpush1.bf16.msra.mxu0 %v775
    %1030 = vmatprep.subr.bf16.mxu0 0
    %1031 = vmatpush1.bf16.msra.mxu0 %v778
    %1032 = vmatprep.subr.bf16.mxu0 0
    %1033 = vmatpush1.bf16.msra.mxu0 %v781
    %1034 = vmatprep.subr.bf16.mxu0 0
    %1035 = vmatpush1.bf16.msra.mxu0 %v784
    %1036 = vmatprep.subr.bf16.mxu0 0
    %1037 = vmatpush1.bf16.msra.mxu0 %v787
    %1038 = vmatprep.mubr.bf16.mxu0 %v226
    %1039 = vmatmul.mubr.bf16.gmra.mrb[0].mxu0 %v225
    %v1040 = vpop.f32.mrb[0].mxu0
    %v1041 = vadd.f32 %v1001, %v1040
    %v1042 = vpop.f32.mrb[0].mxu0
    %v1043 = vpop.f32.mrb[0].mxu0
    %v1044 = vpop.f32.mrb[0].mxu0
    %1045 = vdwg.mxu0
    %v1046 = vmax.f32 %v960, 0.0
    %v1047 = vmax.f32 %v962, 0.0
    %v1048 = vmax.f32 %v1041, 0.0
    %v1049 = vpack.c.bf16 %v1046, %v1046
    %v1050 = vpack.c.bf16 %v1047, %v1047
    %v1051 = vpack.c.bf16 %v1048, %v1048
    %v1052 = vld [vmem:[#allocation9] sm:$0xf]
    %v1053 = vld [vmem:[#allocation9 + $0x4] sm:$0xf]
    %v1054 = vld [vmem:[#allocation9 + $0x8] sm:$0xf]
    %v1055 = vld [vmem:[#allocation9 + $0xc] sm:$0xf]
    %v1056 = vld [vmem:[#allocation9 + $0x10] sm:$0xf]
    %v1057 = vld [vmem:[#allocation9 + $0x14] sm:$0xf]
    %v1058 = vld [vmem:[#allocation9 + $0x18] sm:$0xf]
    %v1059 = vld [vmem:[#allocation9 + $0x1c] sm:$0xf]
    %v1060 = vld [vmem:[#allocation9 + $0x20] sm:$0xf]
    %v1061 = vld [vmem:[#allocation9 + $0x24] sm:$0xf]
    %v1062 = vld [vmem:[#allocation9 + $0x28] sm:$0xf]
    %v1063 = vld [vmem:[#allocation9 + $0x2c] sm:$0xf]
    %v1064 = vld [vmem:[#allocation9 + $0x30] sm:$0xf]
    %v1065 = vld [vmem:[#allocation9 + $0x34] sm:$0xf]
    %v1066 = vld [vmem:[#allocation9 + $0x38] sm:$0xf]
    %v1067 = vld [vmem:[#allocation9 + $0x3c] sm:$0xf]
    %v1068 = vld [vmem:[#allocation9 + $0x40] sm:$0xf]
    %v1069 = vld [vmem:[#allocation9 + $0x44] sm:$0xf]
    %v1070 = vld [vmem:[#allocation9 + $0x48] sm:$0xf]
    %v1071 = vld [vmem:[#allocation9 + $0x4c] sm:$0xf]
    %v1072 = vld [vmem:[#allocation9 + $0x50] sm:$0xf]
    %v1073 = vld [vmem:[#allocation9 + $0x54] sm:$0xf]
    %v1074 = vld [vmem:[#allocation9 + $0x58] sm:$0xf]
    %v1075 = vld [vmem:[#allocation9 + $0x5c] sm:$0xf]
    %v1076 = vld [vmem:[#allocation9 + $0x60] sm:$0xf]
    %v1077 = vld [vmem:[#allocation9 + $0x64] sm:$0xf]
    %v1078 = vld [vmem:[#allocation9 + $0x68] sm:$0xf]
    %v1079 = vld [vmem:[#allocation9 + $0x6c] sm:$0xf]
    %v1080 = vld [vmem:[#allocation9 + $0x70] sm:$0xf]
    %v1081 = vld [vmem:[#allocation9 + $0x74] sm:$0xf]
    %v1082 = vld [vmem:[#allocation9 + $0x78] sm:$0xf]
    %v1083 = vld [vmem:[#allocation9 + $0x7c] sm:$0xf]
    %v1084 = vld [vmem:[#allocation9 + $0x80] sm:$0xf]
    %v1085 = vld [vmem:[#allocation9 + $0x84] sm:$0xf]
    %v1086 = vld [vmem:[#allocation9 + $0x88] sm:$0xf]
    %v1087 = vld [vmem:[#allocation9 + $0x8c] sm:$0xf]
    %v1088 = vld [vmem:[#allocation9 + $0x90] sm:$0xf]
    %v1089 = vld [vmem:[#allocation9 + $0x94] sm:$0xf]
    %v1090 = vld [vmem:[#allocation9 + $0x98] sm:$0xf]
    %v1091 = vld [vmem:[#allocation9 + $0x9c] sm:$0xf]
    %v1092 = vld [vmem:[#allocation9 + $0xa0] sm:$0xf]
    %v1093 = vld [vmem:[#allocation9 + $0xa4] sm:$0xf]
    %v1094 = vld [vmem:[#allocation9 + $0xa8] sm:$0xf]
    %v1095 = vld [vmem:[#allocation9 + $0xac] sm:$0xf]
    %v1096 = vld [vmem:[#allocation9 + $0xb0] sm:$0xf]
    %v1097 = vld [vmem:[#allocation9 + $0xb4] sm:$0xf]
    %v1098 = vld [vmem:[#allocation9 + $0xb8] sm:$0xf]
    %v1099 = vld [vmem:[#allocation9 + $0xbc] sm:$0xf]
    %v1100 = vld [vmem:[%s6] sm:$0x1]
    %v1102 = vlaneseq
    %v1103 = vshrl.u32 %v1102, 7
    %v1104 = vsub.s32 0, %v1103
    %v1105 = vrot.slane %v1100, %v1104
    %v1155 = vunpack.c.l.b16 %v1052
    %v1156 = vunpack.c.l.b16 %v1053
    %v1157 = vunpack.c.l.b16 %v1054
    %v1158 = vunpack.c.l.b16 %v1055
    %v1159 = vunpack.c.l.b16 %v1056
    %v1160 = vunpack.c.l.b16 %v1057
    %v1161 = vunpack.c.l.b16 %v1058
    %v1162 = vunpack.c.l.b16 %v1059
    %v1163 = vunpack.c.l.b16 %v1060
    %v1164 = vunpack.c.l.b16 %v1061
    %v1165 = vunpack.c.l.b16 %v1062
    %v1166 = vunpack.c.l.b16 %v1063
    %v1167 = vunpack.c.l.b16 %v1064
    %v1168 = vunpack.c.l.b16 %v1065
    %v1169 = vunpack.c.l.b16 %v1066
    %v1170 = vunpack.c.l.b16 %v1067
    %v1171 = vunpack.c.l.b16 %v1068
    %v1172 = vunpack.c.l.b16 %v1069
    %v1173 = vunpack.c.l.b16 %v1070
    %v1174 = vunpack.c.l.b16 %v1071
    %v1175 = vunpack.c.l.b16 %v1072
    %v1176 = vunpack.c.l.b16 %v1073
    %v1177 = vunpack.c.l.b16 %v1074
    %v1178 = vunpack.c.l.b16 %v1075
    %v1179 = vunpack.c.l.b16 %v1076
    %v1180 = vunpack.c.l.b16 %v1077
    %v1181 = vunpack.c.l.b16 %v1078
    %v1182 = vunpack.c.l.b16 %v1079
    %v1183 = vunpack.c.l.b16 %v1080
    %v1184 = vunpack.c.l.b16 %v1081
    %v1185 = vunpack.c.l.b16 %v1082
    %v1186 = vunpack.c.l.b16 %v1083
    %v1187 = vunpack.c.l.b16 %v1084
    %v1188 = vunpack.c.l.b16 %v1085
    %v1189 = vunpack.c.l.b16 %v1086
    %v1190 = vunpack.c.l.b16 %v1087
    %v1191 = vunpack.c.l.b16 %v1088
    %v1192 = vunpack.c.l.b16 %v1089
    %v1193 = vunpack.c.l.b16 %v1090
    %v1194 = vunpack.c.l.b16 %v1091
    %v1195 = vunpack.c.l.b16 %v1092
    %v1196 = vunpack.c.l.b16 %v1093
    %v1197 = vunpack.c.l.b16 %v1094
    %v1198 = vunpack.c.l.b16 %v1095
    %v1199 = vunpack.c.l.b16 %v1096
    %v1200 = vunpack.c.l.b16 %v1097
    %v1201 = vunpack.c.l.b16 %v1098
    %v1202 = vunpack.c.l.b16 %v1099
    %v1203 = vpack.c.b16 %v1156, %v1155
    %v1204 = vpack.c.b16 %v1158, %v1157
    %v1205 = vpack.c.b16 %v1160, %v1159
    %v1206 = vpack.c.b16 %v1162, %v1161
    %v1207 = vpack.c.b16 %v1164, %v1163
    %v1208 = vpack.c.b16 %v1166, %v1165
    %v1209 = vpack.c.b16 %v1168, %v1167
    %v1210 = vpack.c.b16 %v1170, %v1169
    %v1211 = vpack.c.b16 %v1172, %v1171
    %v1212 = vpack.c.b16 %v1174, %v1173
    %v1213 = vpack.c.b16 %v1176, %v1175
    %v1214 = vpack.c.b16 %v1178, %v1177
    %v1215 = vpack.c.b16 %v1180, %v1179
    %v1216 = vpack.c.b16 %v1182, %v1181
    %v1217 = vpack.c.b16 %v1184, %v1183
    %v1218 = vpack.c.b16 %v1186, %v1185
    %v1219 = vpack.c.b16 %v1188, %v1187
    %v1220 = vpack.c.b16 %v1190, %v1189
    %v1221 = vpack.c.b16 %v1192, %v1191
    %v1222 = vpack.c.b16 %v1194, %v1193
    %v1223 = vpack.c.b16 %v1196, %v1195
    %v1224 = vpack.c.b16 %v1198, %v1197
    %v1225 = vpack.c.b16 %v1200, %v1199
    %v1226 = vpack.c.b16 %v1202, %v1201
    %1251 = vmatprep.subr.bf16.mxu0 0
    %1252 = vmatpush1.bf16.msra.mxu0 %v1203
    %1253 = vmatprep.subr.bf16.mxu0 0
    %1254 = vmatpush1.bf16.msra.mxu0 %v1204
    %1255 = vmatprep.subr.bf16.mxu0 0
    %1256 = vmatpush1.bf16.msra.mxu0 %v1205
    %1257 = vmatprep.subr.bf16.mxu0 0
    %1258 = vmatpush1.bf16.msra.mxu0 %v1206
    %1259 = vmatprep.subr.bf16.mxu0 0
    %1260 = vmatpush1.bf16.msra.mxu0 %v1207
    %1261 = vmatprep.subr.bf16.mxu0 0
    %1262 = vmatpush1.bf16.msra.mxu0 %v1208
    %1263 = vmatprep.subr.bf16.mxu0 0
    %1264 = vmatpush1.bf16.msra.mxu0 %v1209
    %1265 = vmatprep.subr.bf16.mxu0 0
    %1266 = vmatpush1.bf16.msra.mxu0 %v1210
    %1267 = vmatprep.subr.bf16.mxu0 0
    %1268 = vmatpush1.bf16.msra.mxu0 %v1211
    %1269 = vmatprep.subr.bf16.mxu0 0
    %1270 = vmatpush1.bf16.msra.mxu0 %v1212
    %1271 = vmatprep.subr.bf16.mxu0 0
    %1272 = vmatpush1.bf16.msra.mxu0 %v1213
    %1273 = vmatprep.subr.bf16.mxu0 0
    %1274 = vmatpush1.bf16.msra.mxu0 %v1214
    %1275 = vmatprep.subr.bf16.mxu0 0
    %1276 = vmatpush1.bf16.msra.mxu0 %v1215
    %1277 = vmatprep.subr.bf16.mxu0 0
    %1278 = vmatpush1.bf16.msra.mxu0 %v1216
    %1279 = vmatprep.subr.bf16.mxu0 0
    %1280 = vmatpush1.bf16.msra.mxu0 %v1217
    %1281 = vmatprep.subr.bf16.mxu0 0
    %1282 = vmatpush1.bf16.msra.mxu0 %v1218
    %1283 = vmatprep.mubr.bf16.mxu0 %v1050
    %1284 = vmatmul.mubr.bf16.gmra.mrb[0].mxu0 %v1049
    %v1285 = vpop.f32.mrb[0].mxu0
    %v1286 = vadd.f32 %v1105, %v1285
    %v1287 = vpop.f32.mrb[0].mxu0
    %v1288 = vpop.f32.mrb[0].mxu0
    %v1289 = vpop.f32.mrb[0].mxu0
    %1290 = vdwg.mxu0
    %1291 = vmatprep.subr.bf16.mxu0 0
    %1292 = vmatpush1.bf16.msra.mxu0 %v1219
    %1293 = vmatprep.subr.bf16.mxu0 0
    %1294 = vmatpush1.bf16.msra.mxu0 %v1220
    %1295 = vmatprep.subr.bf16.mxu0 0
    %1296 = vmatpush1.bf16.msra.mxu0 %v1221
    %1297 = vmatprep.subr.bf16.mxu0 0
    %1298 = vmatpush1.bf16.msra.mxu0 %v1222
    %1299 = vmatprep.subr.bf16.mxu0 0
    %1300 = vmatpush1.bf16.msra.mxu0 %v1223
    %1301 = vmatprep.subr.bf16.mxu0 0
    %1302 = vmatpush1.bf16.msra.mxu0 %v1224
    %1303 = vmatprep.subr.bf16.mxu0 0
    %1304 = vmatpush1.bf16.msra.mxu0 %v1225
    %1305 = vmatprep.subr.bf16.mxu0 0
    %1306 = vmatpush1.bf16.msra.mxu0 %v1226
    %1307 = vmatprep.subr.bf16.mxu0 0
    %1308 = vmatpush1.bf16.msra.mxu0 0
    %1309 = vmatprep.subr.bf16.mxu0 0
    %1310 = vmatpush1.bf16.msra.mxu0 0
    %1311 = vmatprep.subr.bf16.mxu0 0
    %1312 = vmatpush1.bf16.msra.mxu0 0
    %1313 = vmatprep.subr.bf16.mxu0 0
    %1314 = vmatpush1.bf16.msra.mxu0 0
    %1315 = vmatprep.subr.bf16.mxu0 0
    %1316 = vmatpush1.bf16.msra.mxu0 0
    %1317 = vmatprep.subr.bf16.mxu0 0
    %1318 = vmatpush1.bf16.msra.mxu0 0
    %1319 = vmatprep.subr.bf16.mxu0 0
    %1320 = vmatpush1.bf16.msra.mxu0 0
    %1321 = vmatprep.subr.bf16.mxu0 0
    %1322 = vmatpush1.bf16.msra.mxu0 0
    %1323 = vmatprep.mubr.bf16.mxu0 0
    %1324 = vmatmul.mubr.bf16.gmra.mrb[0].mxu0 %v1051
    %v1325 = vpop.f32.mrb[0].mxu0
    %v1326 = vadd.f32 %v1286, %v1325
    %v1327 = vpop.f32.mrb[0].mxu0
    %v1328 = vpop.f32.mrb[0].mxu0
    %v1329 = vpop.f32.mrb[0].mxu0
    %1330 = vdwg.mxu0
    %v1331 = vtanh.pop %v1326
    %s1332 = sld [smem:[#allocation2]]
    %v1333 = vstv %s1332
    %v1334 = vmul.f32 %v1331, %v1333
    %1335 = vst [vmem:[#allocation11] sm:$0xff] %v1334
    // Predicated region
    $region50: #{tpu_custom_call.1} parent=1 // pred_check
      _
    $region51: #{tpu_custom_call.1} parent=1 // pred_check_branch
      %1337 = sbr.rel (0) target = $region53
    $region52: #{tpu_custom_call.1} parent=1 // pred_region
      %s1339 = ssub.s32 128, 128
      %1340 = vsyncadd [#allocation5], %s1339
      %s1342 = sshll.u32 [#allocation11], 4
      %s1343 = int_to_ptr.vmem [resolvable:$true] %s1342
      %1345 = dma.vmem_to_hbm [thread:$0]  %s1343, 128, %s8, [#allocation5]
    $region53: #{tpu_custom_call.1} parent=1 // pred_fallthru
      _
    // Predicated region
    $region54: #{tpu_custom_call.1} parent=1 // pred_check
      _
    $region55: #{tpu_custom_call.1} parent=1 // pred_check_branch
      %1347 = sbr.rel (0) target = $region57
    $region56: #{tpu_custom_call.1} parent=1 // pred_region
      %1348 = dma.done [#allocation5], 128
    $region57: #{tpu_custom_call.1} parent=1 // pred_fallthru
      _
    %1349 = vsyncpa [#allocation4], 1
    %1350 = vsyncpa [#allocation7], 1
    %1351 = vsyncpa [#allocation10], 1
    %1352 = vsyncpa [#allocation5], 1

</llo_original>
